<compile_context>
chip_gen: v7x
topology: tpu7x:2x2x1
jax: 0.10.0
libtpu: 0.0.40
codegen_flags: <defaults>
</compile_context>

<pallas_src>
import math

import jax
import jax.numpy as jnp
from jax.experimental import pallas as pl
from jax.experimental.pallas import tpu as pltpu


def _round_up(x, m):
    return ((x + m - 1) // m) * m


def relation_kernel(x_ref, w_ref, r_ref, out_ref):
    """One row-tile of the fused Relation forward.

    x_ref  : (TM, 2*Fp) f32  -- [ft_packed | neighbor_packed]
    w_ref  : (2*Fp, 2*Fp) f32 -- packed block-diagonal weights (VMEM resident)
    r_ref  : (1, Fp)  f32    -- r parameter tiled over the lane packing
    out_ref: (TM, Fp) f32
    """
    fp = out_ref.shape[-1]
    x = x_ref[...]
    # Single MXU contraction replaces the 4 small matmuls:
    #   z[:, :fp]  = ft@Wg1_t + nb@Wg2_t   (gamma pre-activation)
    #   z[:, fp:]  = ft@Wb1_t + nb@Wb2_t   (beta  pre-activation)
    z = jnp.dot(x, w_ref[...], preferred_element_type=jnp.float32)
    a = jnp.where(z > 0, z, 0.2 * z)          # LeakyReLU(0.2)
    gamma = a[:, :fp] + 1.0
    beta = a[:, fp:]
    r_v = gamma * r_ref[...] + beta
    out_ref[...] = x[:, :fp] + r_v - x[:, fp:]   # ft + r_v - neighbor


def relation_forward(ft, neighbor, wg1_t, wg2_t, wb1_t, wb2_t, r, *, tm=512):
    """ft, neighbor: (N, F).  Weights are pre-transposed (in, out).  r: (1, F)."""
    N, F = ft.shape
    dtype = ft.dtype

    # Lane packing factor: fold PACK consecutive nodes into one 128-lane row.
    pack = 128 // F if (F < 128 and 128 % F == 0) else 1
    fp = pack * F

    rows = -(-N // pack)                       # packed rows needed
    tm_eff = min(tm, _round_up(rows, 8))       # block rows: mult of 8
    rows_padded = _round_up(rows, tm_eff)      # full blocks only
    n_padded = rows_padded * pack

    ft_p = jnp.pad(ft, ((0, n_padded - N), (0, 0)))
    nb_p = jnp.pad(neighbor, ((0, n_padded - N), (0, 0)))
    ftp = ft_p.reshape(rows_padded, fp)        # row-major fold: free reshape
    nbp = nb_p.reshape(rows_padded, fp)
    x_cat = jnp.concatenate([ftp, nbp], axis=1)          # (rows, 2*Fp)

    # Packed weights: block-diagonal repeat of each (F,F) weight, arranged so
    # the single contraction produces [gamma_pre | beta_pre].
    eye = jnp.eye(pack, dtype=dtype)
    bd = lambda w: jnp.kron(eye, w)                      # (Fp, Fp) block-diag
    w_pack = jnp.concatenate(
        [jnp.concatenate([bd(wg1_t), bd(wb1_t)], axis=1),
         jnp.concatenate([bd(wg2_t), bd(wb2_t)], axis=1)],
        axis=0)                                          # (2*Fp, 2*Fp)
    r_pack = jnp.tile(r, (1, pack))                      # (1, Fp)

    grid = (rows_padded // tm_eff,)
    flops = 2 * rows_padded * (2 * fp) * (2 * fp)
    bytes_accessed = 4 * (x_cat.size + w_pack.size + r_pack.size
                          + rows_padded * fp)

    out = pl.pallas_call(
        relation_kernel,
        out_shape=jax.ShapeDtypeStruct((rows_padded, fp), dtype),
        grid_spec=pltpu.PrefetchScalarGridSpec(
            num_scalar_prefetch=0,
            grid=grid,
            in_specs=[
                pl.BlockSpec((tm_eff, 2 * fp), lambda i: (i, 0)),  # x_cat tile
                pl.BlockSpec((2 * fp, 2 * fp), lambda i: (0, 0)),  # weights
                pl.BlockSpec((1, fp), lambda i: (0, 0)),           # r
            ],
            out_specs=pl.BlockSpec((tm_eff, fp), lambda i: (i, 0)),
        ),
        compiler_params=pltpu.CompilerParams(
            dimension_semantics=("parallel",),
            vmem_limit_bytes=64 * 1024 * 1024,
        ),
        cost_estimate=pl.CostEstimate(
            flops=flops, transcendentals=0, bytes_accessed=bytes_accessed),
    )(x_cat, w_pack, r_pack)

    # Unfold lane packing and drop the row padding (free reshape + slice).
    return out.reshape(n_padded, F)[:N]


def reference_forward(ft, neighbor, wg1_t, wg2_t, wb1_t, wb2_t, r):
    lrelu = lambda x: jnp.where(x > 0, x, 0.2 * x)
    gamma = lrelu(ft @ wg1_t + neighbor @ wg2_t) + 1.0
    beta = lrelu(ft @ wb1_t + neighbor @ wb2_t)
    r_v = gamma * r + beta
    return ft + r_v - neighbor


if __name__ == "__main__":
    F = 32           # in_features

    key = jax.random.PRNGKey(0)
    keys = jax.random.split(key, 7)

    # Deterministic parameter init (module shapes).  Weights stored
    # pre-transposed as (in, out) so x @ W_t == nn.Linear(x).
    lin_bound = 1.0 / math.sqrt(F)
    wg1_t = jax.random.uniform(keys[0], (F, F), jnp.float32, -lin_bound, lin_bound)
    wg2_t = jax.random.uniform(keys[1], (F, F), jnp.float32, -lin_bound, lin_bound)
    wb1_t = jax.random.uniform(keys[2], (F, F), jnp.float32, -lin_bound, lin_bound)
    wb2_t = jax.random.uniform(keys[3], (F, F), jnp.float32, -lin_bound, lin_bound)
    r = jax.random.uniform(keys[4], (1, F), jnp.float32, -lin_bound, lin_bound)

    ok = True
    for N in (8, 50):    # small batch + a non-multiple-of-pack batch
        kf, kn = jax.random.split(jax.random.fold_in(keys[5], N))
        ft = jax.random.normal(kf, (N, F), jnp.float32)
        neighbor = jax.random.normal(kn, (N, F), jnp.float32)

        out = relation_forward(ft, neighbor, wg1_t, wg2_t, wb1_t, wb2_t, r)
        out = jax.block_until_ready(out)

        ref = reference_forward(ft, neighbor, wg1_t, wg2_t, wb1_t, wb2_t, r)
        ok = ok and out.shape == (N, F)
        ok = ok and bool(jnp.allclose(out, ref, atol=1e-5, rtol=1e-5))

    assert ok
    print("KERNEL_OK")
</pallas_src>

<mosaic_0001>
module attributes {stable_mosaic.version = 11 : i64} {
  func.func @relation_kernel(%arg0: i32, %arg1: memref<8x256xf32, #tpu.memory_space<vmem>>, %arg2: memref<256x256xf32, #tpu.memory_space<vmem>>, %arg3: memref<1x128xf32, #tpu.memory_space<vmem>>, %arg4: memref<8x128xf32, #tpu.memory_space<vmem>>) attributes {dimension_semantics = [#tpu.dimension_semantics<parallel>], iteration_bounds = array<i64: 1>, scalar_prefetch = 0 : i64, scratch_operands = 0 : i64, tpu.core_type = #tpu.core_type<tc>, window_params = [{transform_indices = @transform_0, window_bounds = array<i64: 8, 256>}, {pipeline_mode = #tpu.pipeline_mode<synchronous>, transform_indices = @transform_1, window_bounds = array<i64: 256, 256>}, {pipeline_mode = #tpu.pipeline_mode<synchronous>, transform_indices = @transform_2, window_bounds = array<i64: 1, 128>}, {transform_indices = @transform_3, window_bounds = array<i64: 8, 128>}]} {
    %c0 = arith.constant 0 : index
    %c0_0 = arith.constant 0 : index
    %0 = vector.load %arg1[%c0, %c0_0] : memref<8x256xf32, #tpu.memory_space<vmem>>, vector<8x256xf32>
    %c0_1 = arith.constant 0 : index
    %c0_2 = arith.constant 0 : index
    %1 = vector.load %arg2[%c0_1, %c0_2] : memref<256x256xf32, #tpu.memory_space<vmem>>, vector<256x256xf32>
    %cst = arith.constant dense<0.000000e+00> : vector<8x256xf32>
    %2 = tpu.matmul %0, %1, %cst {dimension_numbers = #tpu.dot_dimension_numbers<[1], [0], [0], [1], [0, 0, 1, 1], [], []>} : vector<8x256xf32>, vector<256x256xf32>, vector<8x256xf32> -> vector<8x256xf32>
    %cst_3 = arith.constant 0.000000e+00 : f32
    %3 = vector.broadcast %cst_3 : f32 to vector<8x256xf32>
    %4 = arith.cmpf ogt, %2, %3 : vector<8x256xf32>
    %cst_4 = arith.constant 2.000000e-01 : f32
    %5 = vector.broadcast %cst_4 : f32 to vector<8x256xf32>
    %6 = arith.mulf %5, %2 : vector<8x256xf32>
    %7 = arith.select %4, %2, %6 : vector<8x256xi1>, vector<8x256xf32>
    %8 = vector.extract_strided_slice %7 {offsets = [0, 0], sizes = [8, 128], strides = [1, 1]} : vector<8x256xf32> to vector<8x128xf32>
    %cst_5 = arith.constant 1.000000e+00 : f32
    %9 = vector.broadcast %cst_5 : f32 to vector<8x128xf32>
    %10 = arith.addf %8, %9 : vector<8x128xf32>
    %11 = vector.extract_strided_slice %7 {offsets = [0, 128], sizes = [8, 128], strides = [1, 1]} : vector<8x256xf32> to vector<8x128xf32>
    %c0_6 = arith.constant 0 : index
    %c0_7 = arith.constant 0 : index
    %12 = vector.load %arg3[%c0_6, %c0_7] : memref<1x128xf32, #tpu.memory_space<vmem>>, vector<1x128xf32>
    %13 = vector.broadcast %12 : vector<1x128xf32> to vector<8x128xf32>
    %14 = arith.mulf %10, %13 : vector<8x128xf32>
    %15 = arith.addf %14, %11 : vector<8x128xf32>
    %16 = vector.extract_strided_slice %0 {offsets = [0, 0], sizes = [8, 128], strides = [1, 1]} : vector<8x256xf32> to vector<8x128xf32>
    %17 = arith.addf %16, %15 : vector<8x128xf32>
    %18 = vector.extract_strided_slice %0 {offsets = [0, 128], sizes = [8, 128], strides = [1, 1]} : vector<8x256xf32> to vector<8x128xf32>
    %19 = arith.subf %17, %18 : vector<8x128xf32>
    %c0_8 = arith.constant 0 : index
    %c0_9 = arith.constant 0 : index
    %20 = vector.load %arg4[%c0_8, %c0_9] : memref<8x128xf32, #tpu.memory_space<vmem>>, vector<8x128xf32>
    tpu.vector_store %arg4[%c0_8, %c0_9], %19 {strides = array<i32>} : memref<8x128xf32, #tpu.memory_space<vmem>>, vector<8x128xf32>,
    return
  }
  func.func @transform_0(%arg0: i32) -> (i32, i32) {
    %c0_i32 = arith.constant 0 : i32
    %c0_i32_0 = arith.constant 0 : i32
    return %arg0, %c0_i32 : i32, i32
  }
  func.func @transform_1(%arg0: i32) -> (i32, i32) {
    %c0_i32 = arith.constant 0 : i32
    %c0_i32_0 = arith.constant 0 : i32
    %c0_i32_1 = arith.constant 0 : i32
    return %c0_i32, %c0_i32_0 : i32, i32
  }
  func.func @transform_2(%arg0: i32) -> (i32, i32) {
    %c0_i32 = arith.constant 0 : i32
    %c0_i32_0 = arith.constant 0 : i32
    %c0_i32_1 = arith.constant 0 : i32
    return %c0_i32, %c0_i32_0 : i32, i32
  }
  func.func @transform_3(%arg0: i32) -> (i32, i32) {
    %c0_i32 = arith.constant 0 : i32
    %c0_i32_0 = arith.constant 0 : i32
    return %arg0, %c0_i32 : i32, i32
  }
}

</mosaic_0001>

<llo_original>
// kernel: tpu_custom_call.1
$region0: #{tpu_custom_call.1}
  #allocation0 [shape = 'u32[]', space=smem, size = 0x4, offset = 0x4, fixed_abs, tag = 'smem constant byte address 0x4 - core index']
  #allocation1 [shape = 'u32[144,128]{1,0:T(1,128)}', space=vmem, size = 0x12000, scoped, tag = 'internal scratch']
  %s0 = inlined_call_operand.hbm [shape: f32[8,256], index: 0, kind: input, shape index: {}]
  %s1 = inlined_call_operand.hbm [shape: f32[256,256], index: 1, kind: input, shape index: {}]
  %s2 = inlined_call_operand.hbm [shape: f32[1,128], index: 2, kind: input, shape index: {}]
  %s3 = inlined_call_operand.hbm [shape: f32[8,128], index: 3, kind: output, shape index: {}]
  %s4 = sld [smem:[#allocation0]]
  $region34: #{tpu_custom_call.1} parent=0
    _
  %s6 = ssub.s32 1, %s4
  %s7 = scalar_select 0, %s6, %s4
  $region1: #{tpu_custom_call.1} parent=0
    #allocation2 [shape = 'u8[8192]{0}', space=vmem, size = 0x2000, scoped, tag = 'input window, operand 0, single buffered']
    #allocation3 [shape = 's32[1]{0}', space=sflag, size = 0x4, scoped, tag = 'scoped memory for tpu_custom_call.1']
    #allocation4 [shape = 's32[1]{0}', space=sflag, size = 0x4, scoped, tag = 'scoped memory for tpu_custom_call.1']
    #allocation5 [shape = 'u8[262144]{0}', space=vmem, size = 0x40000, scoped, tag = 'input window, operand 1, single buffered']
    #allocation6 [shape = 's32[1]{0}', space=sflag, size = 0x4, scoped, tag = 'scoped memory for tpu_custom_call.1']
    #allocation7 [shape = 'u8[512]{0}', space=vmem, size = 0x400, scoped, tag = 'input window, operand 2, single buffered']
    #allocation8 [shape = 'u8[4096]{0}', space=vmem, size = 0x1000, scoped, tag = 'output window, operand 0, single buffered']
    %8 = vsyncpa [#allocation3], 0
    %9 = vsyncpa [#allocation6], 0
    %10 = vsyncpa [#allocation4], 0
    // Predicated region
    $region2: #{tpu_custom_call.1} parent=1 // pred_check
      _
    $region3: #{tpu_custom_call.1} parent=1 // pred_check_branch
      %12 = sbr.rel (0) target = $region5
    $region4: #{tpu_custom_call.1} parent=1 // pred_region
      %s14 = ssub.s32 256, 256
      %15 = vsyncadd [#allocation3], %s14
      %s17 = sshll.u32 [#allocation2], 4
      %s18 = int_to_ptr.vmem [resolvable:$true] %s17
      %20 = dma.hbm_to_vmem [thread:$0]  %s0, 256, %s18, [#allocation3]
    $region5: #{tpu_custom_call.1} parent=1 // pred_fallthru
      _
    // Predicated region
    $region6: #{tpu_custom_call.1} parent=1 // pred_check
      _
    $region7: #{tpu_custom_call.1} parent=1 // pred_check_branch
      %22 = sbr.rel (0) target = $region9
    $region8: #{tpu_custom_call.1} parent=1 // pred_region
      %s24 = ssub.s32 8192, 8192
      %25 = vsyncadd [#allocation6], %s24
      %s26 = sshll.u32 [#allocation5], 4
      %s27 = int_to_ptr.vmem [resolvable:$true] %s26
      %32 = dma.hbm_to_vmem [thread:$0]  %s1, 8192, %s27, [#allocation6], 256, 256, 16
    $region9: #{tpu_custom_call.1} parent=1 // pred_fallthru
      _
    // Predicated region
    $region10: #{tpu_custom_call.1} parent=1 // pred_check
      _
    $region11: #{tpu_custom_call.1} parent=1 // pred_check_branch
      %34 = sbr.rel (0) target = $region13
    $region12: #{tpu_custom_call.1} parent=1 // pred_region
      %s36 = ssub.s32 16, 16
      %37 = vsyncadd [#allocation6], %s36
      %s39 = sshll.u32 [#allocation7], 4
      %s40 = int_to_ptr.vmem [resolvable:$true] %s39
      %42 = dma.hbm_to_vmem [thread:$0]  %s2, 16, %s40, [#allocation6]
    $region13: #{tpu_custom_call.1} parent=1 // pred_fallthru
      _
    // Predicated region
    $region14: #{tpu_custom_call.1} parent=1 // pred_check
      _
    $region15: #{tpu_custom_call.1} parent=1 // pred_check_branch
      %44 = sbr.rel (0) target = $region17
    $region16: #{tpu_custom_call.1} parent=1 // pred_region
      %45 = dma.done [#allocation3], 256
    $region17: #{tpu_custom_call.1} parent=1 // pred_fallthru
      _
    // Predicated region
    $region18: #{tpu_custom_call.1} parent=1 // pred_check
      _
    $region19: #{tpu_custom_call.1} parent=1 // pred_check_branch
      %47 = sbr.rel (0) target = $region21
    $region20: #{tpu_custom_call.1} parent=1 // pred_region
      %48 = dma.done [#allocation6], 8192
    $region21: #{tpu_custom_call.1} parent=1 // pred_fallthru
      _
    // Predicated region
    $region22: #{tpu_custom_call.1} parent=1 // pred_check
      _
    $region23: #{tpu_custom_call.1} parent=1 // pred_check_branch
      %50 = sbr.rel (0) target = $region25
    $region24: #{tpu_custom_call.1} parent=1 // pred_region
      %51 = dma.done [#allocation6], 16
    $region25: #{tpu_custom_call.1} parent=1 // pred_fallthru
      _
    %v52 = vld [vmem:[#allocation2] sm:$0xff]
    %v53 = vld [vmem:[#allocation2 + $0x8] sm:$0xff]
    %v54 = vld [vmem:[#allocation5] sm:$0xff]
    %v55 = vld [vmem:[#allocation5 + $0x8] sm:$0xff]
    %v56 = vld [vmem:[#allocation5 + $0x10] sm:$0xff]
    %v57 = vld [vmem:[#allocation5 + $0x18] sm:$0xff]
    %v58 = vld [vmem:[#allocation5 + $0x20] sm:$0xff]
    %v59 = vld [vmem:[#allocation5 + $0x28] sm:$0xff]
    %v60 = vld [vmem:[#allocation5 + $0x30] sm:$0xff]
    %v61 = vld [vmem:[#allocation5 + $0x38] sm:$0xff]
    %v62 = vld [vmem:[#allocation5 + $0x40] sm:$0xff]
    %v63 = vld [vmem:[#allocation5 + $0x48] sm:$0xff]
    %v64 = vld [vmem:[#allocation5 + $0x50] sm:$0xff]
    %v65 = vld [vmem:[#allocation5 + $0x58] sm:$0xff]
    %v66 = vld [vmem:[#allocation5 + $0x60] sm:$0xff]
    %v67 = vld [vmem:[#allocation5 + $0x68] sm:$0xff]
    %v68 = vld [vmem:[#allocation5 + $0x70] sm:$0xff]
    %v69 = vld [vmem:[#allocation5 + $0x78] sm:$0xff]
    %v70 = vld [vmem:[#allocation5 + $0x80] sm:$0xff]
    %v71 = vld [vmem:[#allocation5 + $0x88] sm:$0xff]
    %v72 = vld [vmem:[#allocation5 + $0x90] sm:$0xff]
    %v73 = vld [vmem:[#allocation5 + $0x98] sm:$0xff]
    %v74 = vld [vmem:[#allocation5 + $0xa0] sm:$0xff]
    %v75 = vld [vmem:[#allocation5 + $0xa8] sm:$0xff]
    %v76 = vld [vmem:[#allocation5 + $0xb0] sm:$0xff]
    %v77 = vld [vmem:[#allocation5 + $0xb8] sm:$0xff]
    %v78 = vld [vmem:[#allocation5 + $0xc0] sm:$0xff]
    %v79 = vld [vmem:[#allocation5 + $0xc8] sm:$0xff]
    %v80 = vld [vmem:[#allocation5 + $0xd0] sm:$0xff]
    %v81 = vld [vmem:[#allocation5 + $0xd8] sm:$0xff]
    %v82 = vld [vmem:[#allocation5 + $0xe0] sm:$0xff]
    %v83 = vld [vmem:[#allocation5 + $0xe8] sm:$0xff]
    %v84 = vld [vmem:[#allocation5 + $0xf0] sm:$0xff]
    %v85 = vld [vmem:[#allocation5 + $0xf8] sm:$0xff]
    %v86 = vld [vmem:[#allocation5 + $0x100] sm:$0xff]
    %v87 = vld [vmem:[#allocation5 + $0x108] sm:$0xff]
    %v88 = vld [vmem:[#allocation5 + $0x110] sm:$0xff]
    %v89 = vld [vmem:[#allocation5 + $0x118] sm:$0xff]
    %v90 = vld [vmem:[#allocation5 + $0x120] sm:$0xff]
    %v91 = vld [vmem:[#allocation5 + $0x128] sm:$0xff]
    %v92 = vld [vmem:[#allocation5 + $0x130] sm:$0xff]
    %v93 = vld [vmem:[#allocation5 + $0x138] sm:$0xff]
    %v94 = vld [vmem:[#allocation5 + $0x140] sm:$0xff]
    %v95 = vld [vmem:[#allocation5 + $0x148] sm:$0xff]
    %v96 = vld [vmem:[#allocation5 + $0x150] sm:$0xff]
    %v97 = vld [vmem:[#allocation5 + $0x158] sm:$0xff]
    %v98 = vld [vmem:[#allocation5 + $0x160] sm:$0xff]
    %v99 = vld [vmem:[#allocation5 + $0x168] sm:$0xff]
    %v100 = vld [vmem:[#allocation5 + $0x170] sm:$0xff]
    %v101 = vld [vmem:[#allocation5 + $0x178] sm:$0xff]
    %v102 = vld [vmem:[#allocation5 + $0x180] sm:$0xff]
    %v103 = vld [vmem:[#allocation5 + $0x188] sm:$0xff]
    %v104 = vld [vmem:[#allocation5 + $0x190] sm:$0xff]
    %v105 = vld [vmem:[#allocation5 + $0x198] sm:$0xff]
    %v106 = vld [vmem:[#allocation5 + $0x1a0] sm:$0xff]
    %v107 = vld [vmem:[#allocation5 + $0x1a8] sm:$0xff]
    %v108 = vld [vmem:[#allocation5 + $0x1b0] sm:$0xff]
    %v109 = vld [vmem:[#allocation5 + $0x1b8] sm:$0xff]
    %v110 = vld [vmem:[#allocation5 + $0x1c0] sm:$0xff]
    %v111 = vld [vmem:[#allocation5 + $0x1c8] sm:$0xff]
    %v112 = vld [vmem:[#allocation5 + $0x1d0] sm:$0xff]
    %v113 = vld [vmem:[#allocation5 + $0x1d8] sm:$0xff]
    %v114 = vld [vmem:[#allocation5 + $0x1e0] sm:$0xff]
    %v115 = vld [vmem:[#allocation5 + $0x1e8] sm:$0xff]
    %v116 = vld [vmem:[#allocation5 + $0x1f0] sm:$0xff]
    %v117 = vld [vmem:[#allocation5 + $0x1f8] sm:$0xff]
    %118 = vmatprep.subr.mxu0 %v55
    %119 = vmatpush1.msra.mxu0 %v54
    %120 = vmatprep.subr.mxu0 %v57
    %121 = vmatpush1.msra.mxu0 %v56
    %122 = vmatprep.subr.mxu0 %v59
    %123 = vmatpush1.msra.mxu0 %v58
    %124 = vmatprep.subr.mxu0 %v61
    %125 = vmatpush1.msra.mxu0 %v60
    %126 = vmatprep.subr.mxu0 %v63
    %127 = vmatpush1.msra.mxu0 %v62
    %128 = vmatprep.subr.mxu0 %v65
    %129 = vmatpush1.msra.mxu0 %v64
    %130 = vmatprep.subr.mxu0 %v67
    %131 = vmatpush1.msra.mxu0 %v66
    %132 = vmatprep.subr.mxu0 %v69
    %133 = vmatpush1.msra.mxu0 %v68
    %134 = vmatprep.subr.mxu0 %v71
    %135 = vmatpush1.msra.mxu0 %v70
    %136 = vmatprep.subr.mxu0 %v73
    %137 = vmatpush1.msra.mxu0 %v72
    %138 = vmatprep.subr.mxu0 %v75
    %139 = vmatpush1.msra.mxu0 %v74
    %140 = vmatprep.subr.mxu0 %v77
    %141 = vmatpush1.msra.mxu0 %v76
    %142 = vmatprep.subr.mxu0 %v79
    %143 = vmatpush1.msra.mxu0 %v78
    %144 = vmatprep.subr.mxu0 %v81
    %145 = vmatpush1.msra.mxu0 %v80
    %146 = vmatprep.subr.mxu0 %v83
    %147 = vmatpush1.msra.mxu0 %v82
    %148 = vmatprep.subr.mxu0 %v85
    %149 = vmatpush1.msra.mxu0 %v84
    %150 = vmatprep.subr.mxu0 %v87
    %151 = vmatpush1.msra.mxu0 %v86
    %152 = vmatprep.subr.mxu0 %v89
    %153 = vmatpush1.msra.mxu0 %v88
    %154 = vmatprep.subr.mxu0 %v91
    %155 = vmatpush1.msra.mxu0 %v90
    %156 = vmatprep.subr.mxu0 %v93
    %157 = vmatpush1.msra.mxu0 %v92
    %158 = vmatprep.subr.mxu0 %v95
    %159 = vmatpush1.msra.mxu0 %v94
    %160 = vmatprep.subr.mxu0 %v97
    %161 = vmatpush1.msra.mxu0 %v96
    %162 = vmatprep.subr.mxu0 %v99
    %163 = vmatpush1.msra.mxu0 %v98
    %164 = vmatprep.subr.mxu0 %v101
    %165 = vmatpush1.msra.mxu0 %v100
    %166 = vmatprep.subr.mxu0 %v103
    %167 = vmatpush1.msra.mxu0 %v102
    %168 = vmatprep.subr.mxu0 %v105
    %169 = vmatpush1.msra.mxu0 %v104
    %170 = vmatprep.subr.mxu0 %v107
    %171 = vmatpush1.msra.mxu0 %v106
    %172 = vmatprep.subr.mxu0 %v109
    %173 = vmatpush1.msra.mxu0 %v108
    %174 = vmatprep.subr.mxu0 %v111
    %175 = vmatpush1.msra.mxu0 %v110
    %176 = vmatprep.subr.mxu0 %v113
    %177 = vmatpush1.msra.mxu0 %v112
    %178 = vmatprep.subr.mxu0 %v115
    %179 = vmatpush1.msra.mxu0 %v114
    %180 = vmatprep.subr.mxu0 %v117
    %181 = vmatpush1.msra.mxu0 %v116
    %182 = vmatprep.mubr.f32.mxu0 %v53
    %183 = vmatmul.mubr.f32.gmra.mrb[0].mxu0 %v52
    %v184 = vpop.f32.mrb[0].mxu0
    %v185 = vadd.f32 0.0, %v184
    %v186 = vpop.f32.mrb[0].mxu0
    %v187 = vadd.f32 0.0, %v186
    %188 = vdwg.mxu0
    %vm189 = vcmp.gt.f32.partialorder %v185, 0.0
    %vm190 = vcmp.gt.f32.partialorder %v187, 0.0
    %v191 = vmul.f32 %v185, 0.2
    %v192 = vmul.f32 %v187, 0.2
    %v193 = vsel %vm189, %v185, %v191
    %v194 = vsel %vm190, %v187, %v192
    %v195 = vadd.f32 %v193, 1.0
    %v196 = vld [vmem:[#allocation7] sm:$0x1]
    %v198 = vlaneseq
    %v199 = vshrl.u32 %v198, 7
    %v200 = vsub.s32 0, %v199
    %v201 = vrot.slane %v196, %v200
    %v203 = vmul.f32 %v195, %v201
    %v204 = vadd.f32 %v203, %v194
    %v205 = vadd.f32 %v52, %v204
    %v206 = vsub.f32 %v205, %v53
    %207 = vst [vmem:[#allocation8] sm:$0xff] %v206
    // Predicated region
    $region26: #{tpu_custom_call.1} parent=1 // pred_check
      _
    $region27: #{tpu_custom_call.1} parent=1 // pred_check_branch
      %209 = sbr.rel (0) target = $region29
    $region28: #{tpu_custom_call.1} parent=1 // pred_region
      %s211 = ssub.s32 128, 128
      %212 = vsyncadd [#allocation4], %s211
      %s214 = sshll.u32 [#allocation8], 4
      %s215 = int_to_ptr.vmem [resolvable:$true] %s214
      %217 = dma.vmem_to_hbm [thread:$0]  %s215, 128, %s3, [#allocation4]
    $region29: #{tpu_custom_call.1} parent=1 // pred_fallthru
      _
    // Predicated region
    $region30: #{tpu_custom_call.1} parent=1 // pred_check
      _
    $region31: #{tpu_custom_call.1} parent=1 // pred_check_branch
      %219 = sbr.rel (0) target = $region33
    $region32: #{tpu_custom_call.1} parent=1 // pred_region
      %220 = dma.done [#allocation4], 128
    $region33: #{tpu_custom_call.1} parent=1 // pred_fallthru
      _
    %221 = vsyncpa [#allocation3], 1
    %222 = vsyncpa [#allocation6], 1
    %223 = vsyncpa [#allocation4], 1

</llo_original>
